<compile_context>
chip_gen: v5e
topology: v5e:2x2
jax: 0.10.0
libtpu: 0.0.40
codegen_flags: <defaults>
</compile_context>

<pallas_src>
import jax
import jax.numpy as jnp
from jax import lax
from jax.experimental import pallas as pl
from jax.experimental.pallas import tpu as pltpu

# Problem sizes (small, consistent with the module: inplanes=16, ratio=1/4).
B = 2
C = 16                      # inplanes
PLANES = int(C * (1 / 4))   # 4
H = W = Z = 8
P = H * W * Z               # 512 spatial positions (lane axis)
EPS = 1e-5                  # LayerNorm default eps

# Packed-parameter column offsets.
#   wpack (C, 2*PLANES + 2): [ conv_mask_w | w1^T | w2 | b2 ]
#   bpack (1, 3*PLANES + 1): [ conv_mask_b | b1 | ln_gamma | ln_beta ]
_WM, _W1, _W2, _B2 = 0, 1, 1 + PLANES, 1 + 2 * PLANES
_BM, _B1, _G, _BE = 0, 1, 1 + PLANES, 1 + 2 * PLANES
WPACK_COLS = 2 * PLANES + 2
BPACK_COLS = 3 * PLANES + 1


# ------------------------------------------------------------------ kernel ---
def _context_block_kernel(x_ref, wpack_ref, bpack_ref, o_ref):
    wpack = wpack_ref[...]                       # (C, 10)
    bpack = bpack_ref[...]                       # (1, 13)
    wm = wpack[:, _WM:_WM + 1]                   # (C, 1)   conv_mask weight
    w1 = wpack[:, _W1:_W1 + PLANES]              # (C, PLANES)  add_conv[0] w^T
    w2 = wpack[:, _W2:_W2 + PLANES]              # (C, PLANES)  add_conv[3] w
    b2 = wpack[:, _B2:_B2 + 1]                   # (C, 1)       add_conv[3] bias
    bm = bpack[:, _BM:_BM + 1]                   # (1, 1)   conv_mask bias
    b1 = bpack[:, _B1:_B1 + PLANES]              # (1, PLANES)  add_conv[0] bias
    g = bpack[:, _G:_G + PLANES]                 # (1, PLANES)  LN gamma
    be = bpack[:, _BE:_BE + PLANES]              # (1, PLANES)  LN beta

    # Static 2-way unroll over batch (grid collapsed to a single step).
    for b in range(B):
        x = x_ref[b]                                                  # (C, P)

        # ---- spatial_pool (pooling_type='att') ----
        logits = jnp.sum(x * wm, axis=0, keepdims=True) + bm          # (1, P)
        m = jnp.max(logits, axis=1, keepdims=True)
        e = jnp.exp(logits - m)                                       # EUP
        denom = jnp.sum(e, axis=1, keepdims=True)                     # (1, 1)
        # Deferred softmax normalization: one (C,1)/(1,1) divide, no (1,P) divide.
        context = jnp.sum(x * e, axis=1, keepdims=True) / denom       # (C, 1)

        # ---- channel_add_conv: conv1x1 -> LayerNorm(planes) -> ReLU -> conv1x1 ----
        t = jnp.sum(w1 * context, axis=0, keepdims=True) + b1         # (1, PLANES)
        mu = jnp.mean(t, axis=1, keepdims=True)
        var = jnp.mean((t - mu) * (t - mu), axis=1, keepdims=True)
        tn = (t - mu) * lax.rsqrt(var + EPS) * g + be
        tr = jnp.maximum(tn, 0.0)                                     # ReLU
        add = jnp.sum(w2 * tr, axis=1, keepdims=True) + b2            # (C, 1)

        # ---- fusion: out = x + channel_add_term (broadcast over spatial) ----
        o_ref[b] = x + add


# ----------------------------------------------------------------- wrapper ---
def pack_params(params):
    """Pack the eight tiny tensors into two lane-packed arrays (done once)."""
    wm, bm, w1t, b1, g, be, w2, b2 = params
    wpack = jnp.concatenate([wm, w1t, w2, b2], axis=1)     # (C, 10)
    bpack = jnp.concatenate([bm, b1, g, be], axis=1)       # (1, 13)
    return wpack, bpack


def context_block(x, wpack, bpack):
    """x: (B, C, H, W, Z) float32 (PyTorch NCDHW-style layout). x is donated."""
    xf = x.reshape(B, C, P)            # contiguous reshape, zero data movement

    out = pl.pallas_call(
        _context_block_kernel,
        out_shape=jax.ShapeDtypeStruct((B, C, P), jnp.float32),
        grid=(1,),                                        # single step, no batch grid
        in_specs=[
            pl.BlockSpec((B, C, P), lambda i: (0, 0, 0)),           # x (lane-dense)
            pl.BlockSpec((C, WPACK_COLS), lambda i: (0, 0)),        # packed weights
            pl.BlockSpec((1, BPACK_COLS), lambda i: (0, 0)),        # packed biases/LN
        ],
        out_specs=pl.BlockSpec((B, C, P), lambda i: (0, 0, 0)),
        input_output_aliases={0: 0},                      # out overwrites x's slab
    )(xf, wpack, bpack)
    return out.reshape(x.shape)


# ------------------------------------------------------- pure-JAX reference --
def reference(x, params):
    wm, bm, w1t, b1, g, be, w2, b2 = params
    xf = x.reshape(B, C, P)
    logits = jnp.einsum('bcp,c->bp', xf, wm[:, 0]) + bm[0, 0]
    attn = jax.nn.softmax(logits, axis=-1)
    context = jnp.einsum('bcp,bp->bc', xf, attn)                  # (B, C)
    t = context @ w1t + b1                                        # (B, PLANES)
    mu = t.mean(axis=-1, keepdims=True)
    var = ((t - mu) ** 2).mean(axis=-1, keepdims=True)
    tn = (t - mu) / jnp.sqrt(var + EPS) * g + be
    tr = jnp.maximum(tn, 0.0)
    add = tr @ w2.T + b2[:, 0]                                    # (B, C)
    return (xf + add[:, :, None]).reshape(x.shape)


# --------------------------------------------------------------------- main --
if __name__ == "__main__":
    key = jax.random.PRNGKey(0)
    ks = jax.random.split(key, 9)

    # Input in PyTorch (B, C, H, W, Z) convention.
    x = jax.random.normal(ks[0], (B, C, H, W, Z), jnp.float32)
    x_shape = x.shape

    # Deterministic synthetic parameters (shapes per the module's __init__).
    wm = 0.3 * jax.random.normal(ks[1], (C, 1), jnp.float32)         # conv_mask w (C->1)
    bm = 0.1 * jax.random.normal(ks[2], (1, 1), jnp.float32)         # conv_mask bias
    w1t = 0.3 * jax.random.normal(ks[3], (C, PLANES), jnp.float32)   # add_conv[0] w^T
    b1 = 0.1 * jax.random.normal(ks[4], (1, PLANES), jnp.float32)
    g = 1.0 + 0.1 * jax.random.normal(ks[5], (1, PLANES), jnp.float32)  # LN gamma
    be = 0.1 * jax.random.normal(ks[6], (1, PLANES), jnp.float32)       # LN beta
    w2 = 0.3 * jax.random.normal(ks[7], (C, PLANES), jnp.float32)    # add_conv[3] w
    b2 = 0.1 * jax.random.normal(ks[8], (C, 1), jnp.float32)
    params = (wm, bm, w1t, b1, g, be, w2, b2)

    # Reference first (it reads x, which is donated to the kernel call below).
    ref = reference(x, params)

    wpack, bpack = pack_params(params)                 # one-time packing, off the hot path
    fn = jax.jit(context_block, donate_argnums=(0,))   # x's HBM slab is reused for out
    out = fn(x, wpack, bpack)
    out = jax.block_until_ready(out)

    assert out.shape == x_shape
    max_err = float(jnp.max(jnp.abs(out - ref)))
    assert bool(jnp.allclose(out, ref, atol=1e-4, rtol=1e-4)), f"max_err={max_err}"
    print("KERNEL_OK")
</pallas_src>

<mosaic_0001>
module attributes {stable_mosaic.version = 11 : i64} {
  func.func @_context_block_kernel(%arg0: i32, %arg1: memref<2x16x512xf32, #tpu.memory_space<vmem>>, %arg2: memref<16x10xf32, #tpu.memory_space<vmem>>, %arg3: memref<1x13xf32, #tpu.memory_space<vmem>>, %arg4: memref<2x16x512xf32, #tpu.memory_space<vmem>>) attributes {dimension_semantics = [#tpu.dimension_semantics<arbitrary>], iteration_bounds = array<i64: 1>, scalar_prefetch = 0 : i64, scratch_operands = 0 : i64, tpu.core_type = #tpu.core_type<tc>, window_params = [{pipeline_mode = #tpu.pipeline_mode<synchronous>, transform_indices = @transform_0, window_bounds = array<i64: 2, 16, 512>}, {pipeline_mode = #tpu.pipeline_mode<synchronous>, transform_indices = @transform_1, window_bounds = array<i64: 16, 10>}, {pipeline_mode = #tpu.pipeline_mode<synchronous>, transform_indices = @transform_2, window_bounds = array<i64: 1, 13>}, {pipeline_mode = #tpu.pipeline_mode<synchronous>, transform_indices = @transform_3, window_bounds = array<i64: 2, 16, 512>}]} {
    %c0 = arith.constant 0 : index
    %c0_0 = arith.constant 0 : index
    %0 = vector.load %arg2[%c0, %c0_0] : memref<16x10xf32, #tpu.memory_space<vmem>>, vector<16x10xf32>
    %c0_1 = arith.constant 0 : index
    %c0_2 = arith.constant 0 : index
    %1 = vector.load %arg3[%c0_1, %c0_2] : memref<1x13xf32, #tpu.memory_space<vmem>>, vector<1x13xf32>
    %2 = vector.extract_strided_slice %0 {offsets = [0, 0], sizes = [16, 1], strides = [1, 1]} : vector<16x10xf32> to vector<16x1xf32>
    %3 = vector.extract_strided_slice %0 {offsets = [0, 1], sizes = [16, 4], strides = [1, 1]} : vector<16x10xf32> to vector<16x4xf32>
    %4 = vector.extract_strided_slice %0 {offsets = [0, 5], sizes = [16, 4], strides = [1, 1]} : vector<16x10xf32> to vector<16x4xf32>
    %5 = vector.extract_strided_slice %0 {offsets = [0, 9], sizes = [16, 1], strides = [1, 1]} : vector<16x10xf32> to vector<16x1xf32>
    %6 = vector.extract_strided_slice %1 {offsets = [0, 0], sizes = [1, 1], strides = [1, 1]} : vector<1x13xf32> to vector<1x1xf32>
    %7 = vector.extract_strided_slice %1 {offsets = [0, 1], sizes = [1, 4], strides = [1, 1]} : vector<1x13xf32> to vector<1x4xf32>
    %8 = vector.extract_strided_slice %1 {offsets = [0, 5], sizes = [1, 4], strides = [1, 1]} : vector<1x13xf32> to vector<1x4xf32>
    %9 = vector.extract_strided_slice %1 {offsets = [0, 9], sizes = [1, 4], strides = [1, 1]} : vector<1x13xf32> to vector<1x4xf32>
    %c0_3 = arith.constant 0 : index
    %c0_4 = arith.constant 0 : index
    %c0_5 = arith.constant 0 : index
    %10 = vector.load %arg1[%c0_3, %c0_4, %c0_5] : memref<2x16x512xf32, #tpu.memory_space<vmem>>, vector<1x16x512xf32>
    %11 = vector.shape_cast %10 : vector<1x16x512xf32> to vector<16x512xf32>
    %12 = vector.broadcast %2 : vector<16x1xf32> to vector<16x512xf32>
    %13 = arith.mulf %11, %12 : vector<16x512xf32>
    %cst = arith.constant dense<0.000000e+00> : vector<512xf32>
    %14 = vector.multi_reduction <add>, %13, %cst [0] : vector<16x512xf32> to vector<512xf32>
    %15 = vector.shape_cast %14 : vector<512xf32> to vector<1x512xf32>
    %16 = vector.broadcast %6 : vector<1x1xf32> to vector<1x512xf32>
    %17 = arith.addf %15, %16 : vector<1x512xf32>
    %cst_6 = arith.constant dense<0xFF800000> : vector<1xf32>
    %18 = vector.multi_reduction <maximumf>, %17, %cst_6 [1] : vector<1x512xf32> to vector<1xf32>
    %19 = vector.shape_cast %18 : vector<1xf32> to vector<1x1xf32>
    %20 = vector.broadcast %19 : vector<1x1xf32> to vector<1x512xf32>
    %21 = arith.subf %17, %20 : vector<1x512xf32>
    %22 = math.exp %21 : vector<1x512xf32>
    %cst_7 = arith.constant dense<0.000000e+00> : vector<1xf32>
    %23 = vector.multi_reduction <add>, %22, %cst_7 [1] : vector<1x512xf32> to vector<1xf32>
    %24 = vector.shape_cast %23 : vector<1xf32> to vector<1x1xf32>
    %25 = vector.broadcast %22 : vector<1x512xf32> to vector<16x512xf32>
    %26 = arith.mulf %11, %25 : vector<16x512xf32>
    %cst_8 = arith.constant dense<0.000000e+00> : vector<16xf32>
    %27 = vector.multi_reduction <add>, %26, %cst_8 [1] : vector<16x512xf32> to vector<16xf32>
    %28 = vector.shape_cast %27 : vector<16xf32> to vector<16x1xf32>
    %29 = vector.broadcast %24 : vector<1x1xf32> to vector<16x1xf32>
    %30 = arith.divf %28, %29 : vector<16x1xf32>
    %31 = vector.broadcast %30 : vector<16x1xf32> to vector<16x4xf32>
    %32 = arith.mulf %3, %31 : vector<16x4xf32>
    %cst_9 = arith.constant dense<0.000000e+00> : vector<4xf32>
    %33 = vector.multi_reduction <add>, %32, %cst_9 [0] : vector<16x4xf32> to vector<4xf32>
    %34 = vector.shape_cast %33 : vector<4xf32> to vector<1x4xf32>
    %35 = arith.addf %34, %7 : vector<1x4xf32>
    %cst_10 = arith.constant dense<0.000000e+00> : vector<1xf32>
    %36 = vector.multi_reduction <add>, %35, %cst_10 [1] : vector<1x4xf32> to vector<1xf32>
    %37 = vector.shape_cast %36 : vector<1xf32> to vector<1x1xf32>
    %cst_11 = arith.constant 4.000000e+00 : f32
    %38 = vector.broadcast %cst_11 : f32 to vector<1x1xf32>
    %39 = arith.divf %37, %38 : vector<1x1xf32>
    %40 = vector.broadcast %39 : vector<1x1xf32> to vector<1x4xf32>
    %41 = arith.subf %35, %40 : vector<1x4xf32>
    %42 = vector.broadcast %39 : vector<1x1xf32> to vector<1x4xf32>
    %43 = arith.subf %35, %42 : vector<1x4xf32>
    %44 = arith.mulf %41, %43 : vector<1x4xf32>
    %cst_12 = arith.constant dense<0.000000e+00> : vector<1xf32>
    %45 = vector.multi_reduction <add>, %44, %cst_12 [1] : vector<1x4xf32> to vector<1xf32>
    %46 = vector.shape_cast %45 : vector<1xf32> to vector<1x1xf32>
    %cst_13 = arith.constant 4.000000e+00 : f32
    %47 = vector.broadcast %cst_13 : f32 to vector<1x1xf32>
    %48 = arith.divf %46, %47 : vector<1x1xf32>
    %49 = vector.broadcast %39 : vector<1x1xf32> to vector<1x4xf32>
    %50 = arith.subf %35, %49 : vector<1x4xf32>
    %cst_14 = arith.constant 9.99999974E-6 : f32
    %51 = vector.broadcast %cst_14 : f32 to vector<1x1xf32>
    %52 = arith.addf %48, %51 : vector<1x1xf32>
    %53 = math.rsqrt %52 : vector<1x1xf32>
    %54 = vector.broadcast %53 : vector<1x1xf32> to vector<1x4xf32>
    %55 = arith.mulf %50, %54 : vector<1x4xf32>
    %56 = arith.mulf %55, %8 : vector<1x4xf32>
    %57 = arith.addf %56, %9 : vector<1x4xf32>
    %cst_15 = arith.constant 0.000000e+00 : f32
    %58 = vector.broadcast %cst_15 : f32 to vector<1x4xf32>
    %59 = arith.maximumf %57, %58 : vector<1x4xf32>
    %60 = vector.broadcast %59 : vector<1x4xf32> to vector<16x4xf32>
    %61 = arith.mulf %4, %60 : vector<16x4xf32>
    %cst_16 = arith.constant dense<0.000000e+00> : vector<16xf32>
    %62 = vector.multi_reduction <add>, %61, %cst_16 [1] : vector<16x4xf32> to vector<16xf32>
    %63 = vector.shape_cast %62 : vector<16xf32> to vector<16x1xf32>
    %64 = arith.addf %63, %5 : vector<16x1xf32>
    %65 = vector.broadcast %64 : vector<16x1xf32> to vector<16x512xf32>
    %66 = arith.addf %11, %65 : vector<16x512xf32>
    %c0_17 = arith.constant 0 : index
    %c0_18 = arith.constant 0 : index
    %c0_19 = arith.constant 0 : index
    %67 = vector.load %arg4[%c0_17, %c0_18, %c0_19] : memref<2x16x512xf32, #tpu.memory_space<vmem>>, vector<1x16x512xf32>
    %68 = vector.shape_cast %67 : vector<1x16x512xf32> to vector<16x512xf32>
    %69 = vector.shape_cast %66 : vector<16x512xf32> to vector<1x16x512xf32>
    tpu.vector_store %arg4[%c0_17, %c0_18, %c0_19], %69 {strides = array<i32>} : memref<2x16x512xf32, #tpu.memory_space<vmem>>, vector<1x16x512xf32>,
    %c1 = arith.constant 1 : index
    %c0_20 = arith.constant 0 : index
    %c0_21 = arith.constant 0 : index
    %70 = vector.load %arg1[%c1, %c0_20, %c0_21] : memref<2x16x512xf32, #tpu.memory_space<vmem>>, vector<1x16x512xf32>
    %71 = vector.shape_cast %70 : vector<1x16x512xf32> to vector<16x512xf32>
    %72 = vector.broadcast %2 : vector<16x1xf32> to vector<16x512xf32>
    %73 = arith.mulf %71, %72 : vector<16x512xf32>
    %cst_22 = arith.constant dense<0.000000e+00> : vector<512xf32>
    %74 = vector.multi_reduction <add>, %73, %cst_22 [0] : vector<16x512xf32> to vector<512xf32>
    %75 = vector.shape_cast %74 : vector<512xf32> to vector<1x512xf32>
    %76 = vector.broadcast %6 : vector<1x1xf32> to vector<1x512xf32>
    %77 = arith.addf %75, %76 : vector<1x512xf32>
    %cst_23 = arith.constant dense<0xFF800000> : vector<1xf32>
    %78 = vector.multi_reduction <maximumf>, %77, %cst_23 [1] : vector<1x512xf32> to vector<1xf32>
    %79 = vector.shape_cast %78 : vector<1xf32> to vector<1x1xf32>
    %80 = vector.broadcast %79 : vector<1x1xf32> to vector<1x512xf32>
    %81 = arith.subf %77, %80 : vector<1x512xf32>
    %82 = math.exp %81 : vector<1x512xf32>
    %cst_24 = arith.constant dense<0.000000e+00> : vector<1xf32>
    %83 = vector.multi_reduction <add>, %82, %cst_24 [1] : vector<1x512xf32> to vector<1xf32>
    %84 = vector.shape_cast %83 : vector<1xf32> to vector<1x1xf32>
    %85 = vector.broadcast %82 : vector<1x512xf32> to vector<16x512xf32>
    %86 = arith.mulf %71, %85 : vector<16x512xf32>
    %cst_25 = arith.constant dense<0.000000e+00> : vector<16xf32>
    %87 = vector.multi_reduction <add>, %86, %cst_25 [1] : vector<16x512xf32> to vector<16xf32>
    %88 = vector.shape_cast %87 : vector<16xf32> to vector<16x1xf32>
    %89 = vector.broadcast %84 : vector<1x1xf32> to vector<16x1xf32>
    %90 = arith.divf %88, %89 : vector<16x1xf32>
    %91 = vector.broadcast %90 : vector<16x1xf32> to vector<16x4xf32>
    %92 = arith.mulf %3, %91 : vector<16x4xf32>
    %cst_26 = arith.constant dense<0.000000e+00> : vector<4xf32>
    %93 = vector.multi_reduction <add>, %92, %cst_26 [0] : vector<16x4xf32> to vector<4xf32>
    %94 = vector.shape_cast %93 : vector<4xf32> to vector<1x4xf32>
    %95 = arith.addf %94, %7 : vector<1x4xf32>
    %cst_27 = arith.constant dense<0.000000e+00> : vector<1xf32>
    %96 = vector.multi_reduction <add>, %95, %cst_27 [1] : vector<1x4xf32> to vector<1xf32>
    %97 = vector.shape_cast %96 : vector<1xf32> to vector<1x1xf32>
    %cst_28 = arith.constant 4.000000e+00 : f32
    %98 = vector.broadcast %cst_28 : f32 to vector<1x1xf32>
    %99 = arith.divf %97, %98 : vector<1x1xf32>
    %100 = vector.broadcast %99 : vector<1x1xf32> to vector<1x4xf32>
    %101 = arith.subf %95, %100 : vector<1x4xf32>
    %102 = vector.broadcast %99 : vector<1x1xf32> to vector<1x4xf32>
    %103 = arith.subf %95, %102 : vector<1x4xf32>
    %104 = arith.mulf %101, %103 : vector<1x4xf32>
    %cst_29 = arith.constant dense<0.000000e+00> : vector<1xf32>
    %105 = vector.multi_reduction <add>, %104, %cst_29 [1] : vector<1x4xf32> to vector<1xf32>
    %106 = vector.shape_cast %105 : vector<1xf32> to vector<1x1xf32>
    %cst_30 = arith.constant 4.000000e+00 : f32
    %107 = vector.broadcast %cst_30 : f32 to vector<1x1xf32>
    %108 = arith.divf %106, %107 : vector<1x1xf32>
    %109 = vector.broadcast %99 : vector<1x1xf32> to vector<1x4xf32>
    %110 = arith.subf %95, %109 : vector<1x4xf32>
    %cst_31 = arith.constant 9.99999974E-6 : f32
    %111 = vector.broadcast %cst_31 : f32 to vector<1x1xf32>
    %112 = arith.addf %108, %111 : vector<1x1xf32>
    %113 = math.rsqrt %112 : vector<1x1xf32>
    %114 = vector.broadcast %113 : vector<1x1xf32> to vector<1x4xf32>
    %115 = arith.mulf %110, %114 : vector<1x4xf32>
    %116 = arith.mulf %115, %8 : vector<1x4xf32>
    %117 = arith.addf %116, %9 : vector<1x4xf32>
    %cst_32 = arith.constant 0.000000e+00 : f32
    %118 = vector.broadcast %cst_32 : f32 to vector<1x4xf32>
    %119 = arith.maximumf %117, %118 : vector<1x4xf32>
    %120 = vector.broadcast %119 : vector<1x4xf32> to vector<16x4xf32>
    %121 = arith.mulf %4, %120 : vector<16x4xf32>
    %cst_33 = arith.constant dense<0.000000e+00> : vector<16xf32>
    %122 = vector.multi_reduction <add>, %121, %cst_33 [1] : vector<16x4xf32> to vector<16xf32>
    %123 = vector.shape_cast %122 : vector<16xf32> to vector<16x1xf32>
    %124 = arith.addf %123, %5 : vector<16x1xf32>
    %125 = vector.broadcast %124 : vector<16x1xf32> to vector<16x512xf32>
    %126 = arith.addf %71, %125 : vector<16x512xf32>
    %c1_34 = arith.constant 1 : index
    %c0_35 = arith.constant 0 : index
    %c0_36 = arith.constant 0 : index
    %127 = vector.load %arg4[%c1_34, %c0_35, %c0_36] : memref<2x16x512xf32, #tpu.memory_space<vmem>>, vector<1x16x512xf32>
    %128 = vector.shape_cast %127 : vector<1x16x512xf32> to vector<16x512xf32>
    %129 = vector.shape_cast %126 : vector<16x512xf32> to vector<1x16x512xf32>
    tpu.vector_store %arg4[%c1_34, %c0_35, %c0_36], %129 {strides = array<i32>} : memref<2x16x512xf32, #tpu.memory_space<vmem>>, vector<1x16x512xf32>,
    return
  }
  func.func @transform_0(%arg0: i32) -> (i32, i32, i32) {
    %c0_i32 = arith.constant 0 : i32
    %c0_i32_0 = arith.constant 0 : i32
    %c0_i32_1 = arith.constant 0 : i32
    %c0_i32_2 = arith.constant 0 : i32
    return %c0_i32, %c0_i32_0, %c0_i32_1 : i32, i32, i32
  }
  func.func @transform_1(%arg0: i32) -> (i32, i32) {
    %c0_i32 = arith.constant 0 : i32
    %c0_i32_0 = arith.constant 0 : i32
    %c0_i32_1 = arith.constant 0 : i32
    return %c0_i32, %c0_i32_0 : i32, i32
  }
  func.func @transform_2(%arg0: i32) -> (i32, i32) {
    %c0_i32 = arith.constant 0 : i32
    %c0_i32_0 = arith.constant 0 : i32
    %c0_i32_1 = arith.constant 0 : i32
    return %c0_i32, %c0_i32_0 : i32, i32
  }
  func.func @transform_3(%arg0: i32) -> (i32, i32, i32) {
    %c0_i32 = arith.constant 0 : i32
    %c0_i32_0 = arith.constant 0 : i32
    %c0_i32_1 = arith.constant 0 : i32
    %c0_i32_2 = arith.constant 0 : i32
    return %c0_i32, %c0_i32_0, %c0_i32_1 : i32, i32, i32
  }
}

</mosaic_0001>

<llo_original>
// kernel: context_block.1
$region0: #{context_block.1}
  #allocation0 [shape = 'u32[]', space=smem, size = 0x4, offset = 0x4, fixed_abs, tag = 'smem constant byte address 0x4 - core index']
  #allocation1 [shape = 'u32[72,128]{1,0:T(1,128)}', space=vmem, size = 0x9000, scoped, tag = 'internal scratch']
  %s0 = inlined_call_operand.vmem [shape: f32[2,16,512], index: 0, kind: input, shape index: {}, may-alias: {0,3}]
  %s1 = inlined_call_operand.vmem [shape: f32[16,10], index: 1, kind: input, shape index: {}]
  %s2 = inlined_call_operand.vmem [shape: f32[1,13], index: 2, kind: input, shape index: {}]
  %s3 = inlined_call_operand.vmem [shape: f32[2,16,512], index: 3, kind: output, shape index: {}, may-alias: {0,3}]
  %s4 = sld [smem:[#allocation0]]
  $region22: #{context_block.1} parent=0
    _
  %s6 = ssub.s32 1, %s4
  %s7 = scalar_select 0, %s6, %s4
  // Predicated region
  $region2: #{context_block.1} parent=0 // pred_check
    _
  $region3: #{context_block.1} parent=0 // pred_check_branch
    %9 = sbr.rel (0) target = $region5
  $region4: #{context_block.1} parent=0 // pred_region
    _
  $region5: #{context_block.1} parent=0 // pred_fallthru
    _
  // Predicated region
  $region6: #{context_block.1} parent=0 // pred_check
    _
  $region7: #{context_block.1} parent=0 // pred_check_branch
    %11 = sbr.rel (0) target = $region9
  $region8: #{context_block.1} parent=0 // pred_region
    _
  $region9: #{context_block.1} parent=0 // pred_fallthru
    _
  // Predicated region
  $region10: #{context_block.1} parent=0 // pred_check
    _
  $region11: #{context_block.1} parent=0 // pred_check_branch
    %13 = sbr.rel (0) target = $region13
  $region12: #{context_block.1} parent=0 // pred_region
    _
  $region13: #{context_block.1} parent=0 // pred_fallthru
    _
  %v14 = vld [vmem:[%s1] sm:$0xff]
  %v15 = vld [vmem:[%s1 + $0x8] sm:$0xff]
  %v16 = vld [vmem:[%s2] sm:$0x1]
  %v17 = vld [vmem:[%s0] sm:$0xff]
  %v18 = vld [vmem:[%s0 + $0x8] sm:$0xff]
  %v19 = vld [vmem:[%s0 + $0x10] sm:$0xff]
  %v20 = vld [vmem:[%s0 + $0x18] sm:$0xff]
  %v21 = vld [vmem:[%s0 + $0x20] sm:$0xff]
  %v22 = vld [vmem:[%s0 + $0x28] sm:$0xff]
  %v23 = vld [vmem:[%s0 + $0x30] sm:$0xff]
  %v24 = vld [vmem:[%s0 + $0x38] sm:$0xff]
  %26 = vset.pattern.permute.xlu0 0
  %27 = vperm.xlu0 %26, %v14
  %v28 = vpop.permute.xlu0 %27
  %31 = vset.pattern.permute.xlu0 0
  %32 = vperm.xlu0 %31, %v15
  %v33 = vpop.permute.xlu0 %32
  %v35 = vmul.f32 %v17, %v28
  %v36 = vmul.f32 %v18, %v28
  %v37 = vmul.f32 %v19, %v28
  %v38 = vmul.f32 %v20, %v28
  %v39 = vmul.f32 %v21, %v33
  %v40 = vmul.f32 %v22, %v33
  %v41 = vmul.f32 %v23, %v33
  %v42 = vmul.f32 %v24, %v33
  %v43 = vadd.f32 %v35, %v39
  %v44 = vrot.slane %v43, 4
  %v45 = vadd.f32 %v43, %v44
  %v46 = vrot.slane %v45, 2
  %v47 = vadd.f32 %v45, %v46
  %v48 = vrot.slane %v47, 1
  %v49 = vadd.f32 %v47, %v48
  %v50 = vadd.f32 %v36, %v40
  %v51 = vrot.slane %v50, 4
  %v52 = vadd.f32 %v50, %v51
  %v53 = vrot.slane %v52, 2
  %v54 = vadd.f32 %v52, %v53
  %v55 = vrot.slane %v54, 1
  %v56 = vadd.f32 %v54, %v55
  %v57 = vadd.f32 %v37, %v41
  %v58 = vrot.slane %v57, 4
  %v59 = vadd.f32 %v57, %v58
  %v60 = vrot.slane %v59, 2
  %v61 = vadd.f32 %v59, %v60
  %v62 = vrot.slane %v61, 1
  %v63 = vadd.f32 %v61, %v62
  %v64 = vadd.f32 %v38, %v42
  %v65 = vrot.slane %v64, 4
  %v66 = vadd.f32 %v64, %v65
  %v67 = vrot.slane %v66, 2
  %v68 = vadd.f32 %v66, %v67
  %v69 = vrot.slane %v68, 1
  %v70 = vadd.f32 %v68, %v69
  %72 = vset.pattern.permute.xlu0 0
  %73 = vperm.xlu0 %72, %v16
  %v74 = vpop.permute.xlu0 %73
  %v76 = vperm.slane %v74, 0
  %v77 = vadd.f32 %v49, %v76
  %v78 = vadd.f32 %v56, %v76
  %v79 = vadd.f32 %v63, %v76
  %v80 = vadd.f32 %v70, %v76
  %v81 = vmax.f32 %v77, %v78
  %v82 = vmax.f32 %v79, %v80
  %v83 = vmax.f32 %v81, %v82
  %84 = vmax.xlane.f32.xlu0 %v83
  %v85 = vpop.xlane.xlu0 %84
  %v86 = vsub.f32 %v77, %v85
  %v87 = vsub.f32 %v78, %v85
  %v88 = vsub.f32 %v79, %v85
  %v89 = vsub.f32 %v80, %v85
  %v90 = vmul.f32 %v86, 1.442695
  %v91 = vpow.pop %v90
  %v92 = vmul.f32 %v87, 1.442695
  %v93 = vpow.pop %v92
  %v94 = vmul.f32 %v88, 1.442695
  %v95 = vpow.pop %v94
  %v96 = vmul.f32 %v89, 1.442695
  %v97 = vpow.pop %v96
  %v98 = vadd.f32 %v91, %v93
  %v99 = vadd.f32 %v98, %v95
  %v100 = vadd.f32 %v99, %v97
  %101 = vadd.xlane.f32.xlu0 %v100
  %v102 = vpop.xlane.xlu0 %101
  %v103 = vmul.f32 %v17, %v91
  %v104 = vmul.f32 %v18, %v93
  %v105 = vmul.f32 %v19, %v95
  %v106 = vmul.f32 %v20, %v97
  %v107 = vmul.f32 %v21, %v91
  %v108 = vmul.f32 %v22, %v93
  %v109 = vmul.f32 %v23, %v95
  %v110 = vmul.f32 %v24, %v97
  %v111 = vadd.f32 %v103, %v104
  %v112 = vadd.f32 %v111, %v105
  %v113 = vadd.f32 %v112, %v106
  %114 = vadd.xlane.f32.xlu0 %v113
  %v115 = vpop.xlane.xlu0 %114
  %v116 = vadd.f32 %v107, %v108
  %v117 = vadd.f32 %v116, %v109
  %v118 = vadd.f32 %v117, %v110
  %119 = vadd.xlane.f32.xlu0 %v118
  %v120 = vpop.xlane.xlu0 %119
  %v121 = vrcp.pop %v102
  %v122 = vmul.f32 %v102, %v121
  %v123 = vsub.f32 1.0, %v122
  %v124 = vmul.f32 %v121, %v123
  %v125 = vadd.f32 %v121, %v124
  %vm126 = vweird.f32 %v102
  %vm127 = vweird.f32 %v121
  %vm128 = vmor %vm126, %vm127
  %v129 = vsel %vm128, %v121, %v125
  %v130 = vand.u32 2147483647, %v102
  %vm131 = vcmp.eq.f32.partialorder %v130, 8.507059e+37
  %v132 = vand.u32 %v102, 2147483648
  %v133 = vor.u32 1.1754944e-38, %v132
  %v134 = vsel %vm131, %v133, %v129
  %v135 = vmul.f32 %v115, %v134
  %v136 = vmul.f32 %v120, %v134
  %v137 = vmul.f32 %v14, %v135
  %v138 = vmul.f32 %v15, %v136
  %vm139 = vcmask 39944
  %v140 = vsel %vm139, %v137, 0.0
  %v141 = vsel %vm139, %v138, 0.0
  %v142 = vadd.f32 %v140, %v141
  %v143 = vrot.slane %v142, 4
  %v144 = vadd.f32 %v142, %v143
  %v145 = vrot.slane %v144, 2
  %v146 = vadd.f32 %v144, %v145
  %v147 = vrot.slane %v146, 1
  %v148 = vadd.f32 %v146, %v147
  %v149 = vadd.f32 %v148, %v16
  %151 = vrot.lane.b32.xlu0 %v149, 127
  %v152 = vpop.permute.xlu0 %151
  %vm154 = vcmask 24576
  %v155 = vsel %vm154, %v152, 0.0
  %156 = vadd.xlane.f32.xlu0 %v155
  %v157 = vpop.xlane.xlu0 %156
  %v158 = vrcp.pop 4.0
  %v159 = vmul.f32 4.0, %v158
  %v160 = vsub.f32 1.0, %v159
  %v161 = vmul.f32 %v158, %v160
  %v162 = vadd.f32 %v158, %v161
  %vm163 = vweird.f32 %v158
  %v164 = vsel %vm163, %v158, %v162
  %v165 = vmul.f32 %v157, %v164
  %v166 = vsub.f32 %v149, %v165
  %v167 = vmul.f32 %v166, %v166
  %169 = vrot.lane.b32.xlu0 %v167, 127
  %v170 = vpop.permute.xlu0 %169
  %v172 = vsel %vm154, %v170, 0.0
  %173 = vadd.xlane.f32.xlu0 %v172
  %v174 = vpop.xlane.xlu0 %173
  %v175 = vmul.f32 %v174, %v164
  %v176 = vadd.f32 %v175, 1e-05
  %v177 = vrsqrt.pop %v176
  %v178 = vmul.f32 %v177, %v176
  %v179 = vmul.f32 %v178, %v177
  %v180 = vmul.f32 0.5, %v179
  %v181 = vsub.f32 1.5, %v180
  %v182 = vmul.f32 %v177, %v181
  %vm183 = vweird.f32 %v176
  %vm184 = vweird.f32 %v177
  %vm185 = vmor %vm183, %vm184
  %v186 = vsel %vm185, %v177, %v182
  %v187 = vmul.f32 %v166, %v186
  %v188 = vperm.slane %v16, 0
  %189 = vrot.lane.b32.xlu0 %v188, 124
  %v190 = vpop.permute.xlu0 %189
  %v192 = vmul.f32 %v187, %v190
  %193 = vrot.lane.b32.xlu0 %v188, 120
  %v194 = vpop.permute.xlu0 %193
  %v196 = vadd.f32 %v192, %v194
  %v197 = vmax.f32 %v196, 0.0
  %v198 = vperm.slane %v197, 0
  %200 = vrot.lane.b32.xlu0 %v198, 4
  %v201 = vpop.permute.xlu0 %200
  %v203 = vmul.f32 %v14, %v201
  %v204 = vmul.f32 %v15, %v201
  %207 = vrot.lane.b32.xlu0 %v203, 123
  %v208 = vpop.permute.xlu0 %207
  %209 = vrot.lane.b32.xlu0 %v204, 123
  %v210 = vpop.permute.xlu0 %209
  %vm213 = vcmask 31744
  %v214 = vsel %vm213, %v208, 0.0
  %215 = vadd.xlane.f32.xlu0 %v214
  %v216 = vpop.xlane.xlu0 %215
  %v217 = vsel %vm213, %v210, 0.0
  %218 = vadd.xlane.f32.xlu0 %v217
  %v219 = vpop.xlane.xlu0 %218
  %v220 = vadd.f32 %v216, %v14
  %v221 = vadd.f32 %v219, %v15
  %223 = vset.pattern.permute.xlu0 9
  %224 = vperm.xlu0 %223, %v220
  %v225 = vpop.permute.xlu0 %224
  %228 = vset.pattern.permute.xlu0 9
  %229 = vperm.xlu0 %228, %v221
  %v230 = vpop.permute.xlu0 %229
  %v232 = vadd.f32 %v17, %v225
  %v233 = vadd.f32 %v18, %v225
  %v234 = vadd.f32 %v19, %v225
  %v235 = vadd.f32 %v20, %v225
  %v236 = vadd.f32 %v21, %v230
  %v237 = vadd.f32 %v22, %v230
  %v238 = vadd.f32 %v23, %v230
  %v239 = vadd.f32 %v24, %v230
  %240 = vst [vmem:[%s3] sm:$0xff] %v232
  %241 = vst [vmem:[%s3 + $0x8] sm:$0xff] %v233
  %242 = vst [vmem:[%s3 + $0x10] sm:$0xff] %v234
  %243 = vst [vmem:[%s3 + $0x18] sm:$0xff] %v235
  %244 = vst [vmem:[%s3 + $0x20] sm:$0xff] %v236
  %245 = vst [vmem:[%s3 + $0x28] sm:$0xff] %v237
  %246 = vst [vmem:[%s3 + $0x30] sm:$0xff] %v238
  %247 = vst [vmem:[%s3 + $0x38] sm:$0xff] %v239
  %s248 = scalar_lea.vmem %s0, 64
  %v249 = vld [vmem:[%s248] sm:$0xff]
  %v250 = vld [vmem:[%s248 + $0x8] sm:$0xff]
  %v251 = vld [vmem:[%s248 + $0x10] sm:$0xff]
  %v252 = vld [vmem:[%s248 + $0x18] sm:$0xff]
  %v253 = vld [vmem:[%s248 + $0x20] sm:$0xff]
  %v254 = vld [vmem:[%s248 + $0x28] sm:$0xff]
  %v255 = vld [vmem:[%s248 + $0x30] sm:$0xff]
  %v256 = vld [vmem:[%s248 + $0x38] sm:$0xff]
  %v257 = vmul.f32 %v249, %v28
  %v258 = vmul.f32 %v250, %v28
  %v259 = vmul.f32 %v251, %v28
  %v260 = vmul.f32 %v252, %v28
  %v261 = vmul.f32 %v253, %v33
  %v262 = vmul.f32 %v254, %v33
  %v263 = vmul.f32 %v255, %v33
  %v264 = vmul.f32 %v256, %v33
  %v265 = vadd.f32 %v257, %v261
  %v266 = vrot.slane %v265, 4
  %v267 = vadd.f32 %v265, %v266
  %v268 = vrot.slane %v267, 2
  %v269 = vadd.f32 %v267, %v268
  %v270 = vrot.slane %v269, 1
  %v271 = vadd.f32 %v269, %v270
  %v272 = vadd.f32 %v258, %v262
  %v273 = vrot.slane %v272, 4
  %v274 = vadd.f32 %v272, %v273
  %v275 = vrot.slane %v274, 2
  %v276 = vadd.f32 %v274, %v275
  %v277 = vrot.slane %v276, 1
  %v278 = vadd.f32 %v276, %v277
  %v279 = vadd.f32 %v259, %v263
  %v280 = vrot.slane %v279, 4
  %v281 = vadd.f32 %v279, %v280
  %v282 = vrot.slane %v281, 2
  %v283 = vadd.f32 %v281, %v282
  %v284 = vrot.slane %v283, 1
  %v285 = vadd.f32 %v283, %v284
  %v286 = vadd.f32 %v260, %v264
  %v287 = vrot.slane %v286, 4
  %v288 = vadd.f32 %v286, %v287
  %v289 = vrot.slane %v288, 2
  %v290 = vadd.f32 %v288, %v289
  %v291 = vrot.slane %v290, 1
  %v292 = vadd.f32 %v290, %v291
  %v293 = vadd.f32 %v271, %v76
  %v294 = vadd.f32 %v278, %v76
  %v295 = vadd.f32 %v285, %v76
  %v296 = vadd.f32 %v292, %v76
  %v297 = vmax.f32 %v293, %v294
  %v298 = vmax.f32 %v295, %v296
  %v299 = vmax.f32 %v297, %v298
  %300 = vmax.xlane.f32.xlu0 %v299
  %v301 = vpop.xlane.xlu0 %300
  %v302 = vsub.f32 %v293, %v301
  %v303 = vsub.f32 %v294, %v301
  %v304 = vsub.f32 %v295, %v301
  %v305 = vsub.f32 %v296, %v301
  %v306 = vmul.f32 %v302, 1.442695
  %v307 = vpow.pop %v306
  %v308 = vmul.f32 %v303, 1.442695
  %v309 = vpow.pop %v308
  %v310 = vmul.f32 %v304, 1.442695
  %v311 = vpow.pop %v310
  %v312 = vmul.f32 %v305, 1.442695
  %v313 = vpow.pop %v312
  %v314 = vadd.f32 %v307, %v309
  %v315 = vadd.f32 %v314, %v311
  %v316 = vadd.f32 %v315, %v313
  %317 = vadd.xlane.f32.xlu0 %v316
  %v318 = vpop.xlane.xlu0 %317
  %v319 = vmul.f32 %v249, %v307
  %v320 = vmul.f32 %v250, %v309
  %v321 = vmul.f32 %v251, %v311
  %v322 = vmul.f32 %v252, %v313
  %v323 = vmul.f32 %v253, %v307
  %v324 = vmul.f32 %v254, %v309
  %v325 = vmul.f32 %v255, %v311
  %v326 = vmul.f32 %v256, %v313
  %v327 = vadd.f32 %v319, %v320
  %v328 = vadd.f32 %v327, %v321
  %v329 = vadd.f32 %v328, %v322
  %330 = vadd.xlane.f32.xlu0 %v329
  %v331 = vpop.xlane.xlu0 %330
  %v332 = vadd.f32 %v323, %v324
  %v333 = vadd.f32 %v332, %v325
  %v334 = vadd.f32 %v333, %v326
  %335 = vadd.xlane.f32.xlu0 %v334
  %v336 = vpop.xlane.xlu0 %335
  %v337 = vrcp.pop %v318
  %v338 = vmul.f32 %v318, %v337
  %v339 = vsub.f32 1.0, %v338
  %v340 = vmul.f32 %v337, %v339
  %v341 = vadd.f32 %v337, %v340
  %vm342 = vweird.f32 %v318
  %vm343 = vweird.f32 %v337
  %vm344 = vmor %vm342, %vm343
  %v345 = vsel %vm344, %v337, %v341
  %v346 = vand.u32 2147483647, %v318
  %vm347 = vcmp.eq.f32.partialorder %v346, 8.507059e+37
  %v348 = vand.u32 %v318, 2147483648
  %v349 = vor.u32 1.1754944e-38, %v348
  %v350 = vsel %vm347, %v349, %v345
  %v351 = vmul.f32 %v331, %v350
  %v352 = vmul.f32 %v336, %v350
  %v353 = vmul.f32 %v14, %v351
  %v354 = vmul.f32 %v15, %v352
  %v355 = vsel %vm139, %v353, 0.0
  %v356 = vsel %vm139, %v354, 0.0
  %v357 = vadd.f32 %v355, %v356
  %v358 = vrot.slane %v357, 4
  %v359 = vadd.f32 %v357, %v358
  %v360 = vrot.slane %v359, 2
  %v361 = vadd.f32 %v359, %v360
  %v362 = vrot.slane %v361, 1
  %v363 = vadd.f32 %v361, %v362
  %v364 = vadd.f32 %v363, %v16
  %366 = vrot.lane.b32.xlu0 %v364, 127
  %v367 = vpop.permute.xlu0 %366
  %v369 = vsel %vm154, %v367, 0.0
  %370 = vadd.xlane.f32.xlu0 %v369
  %v371 = vpop.xlane.xlu0 %370
  %v372 = vmul.f32 %v371, %v164
  %v373 = vsub.f32 %v364, %v372
  %v374 = vmul.f32 %v373, %v373
  %376 = vrot.lane.b32.xlu0 %v374, 127
  %v377 = vpop.permute.xlu0 %376
  %v379 = vsel %vm154, %v377, 0.0
  %380 = vadd.xlane.f32.xlu0 %v379
  %v381 = vpop.xlane.xlu0 %380
  %v382 = vmul.f32 %v381, %v164
  %v383 = vadd.f32 %v382, 1e-05
  %v384 = vrsqrt.pop %v383
  %v385 = vmul.f32 %v384, %v383
  %v386 = vmul.f32 %v385, %v384
  %v387 = vmul.f32 0.5, %v386
  %v388 = vsub.f32 1.5, %v387
  %v389 = vmul.f32 %v384, %v388
  %vm390 = vweird.f32 %v383
  %vm391 = vweird.f32 %v384
  %vm392 = vmor %vm390, %vm391
  %v393 = vsel %vm392, %v384, %v389
  %v394 = vmul.f32 %v373, %v393
  %v395 = vmul.f32 %v394, %v190
  %v396 = vadd.f32 %v395, %v194
  %v397 = vmax.f32 %v396, 0.0
  %v398 = vperm.slane %v397, 0
  %400 = vrot.lane.b32.xlu0 %v398, 4
  %v401 = vpop.permute.xlu0 %400
  %v403 = vmul.f32 %v14, %v401
  %v404 = vmul.f32 %v15, %v401
  %407 = vrot.lane.b32.xlu0 %v403, 123
  %v408 = vpop.permute.xlu0 %407
  %409 = vrot.lane.b32.xlu0 %v404, 123
  %v410 = vpop.permute.xlu0 %409
  %v413 = vsel %vm213, %v408, 0.0
  %414 = vadd.xlane.f32.xlu0 %v413
  %v415 = vpop.xlane.xlu0 %414
  %v416 = vsel %vm213, %v410, 0.0
  %417 = vadd.xlane.f32.xlu0 %v416
  %v418 = vpop.xlane.xlu0 %417
  %v419 = vadd.f32 %v415, %v14
  %v420 = vadd.f32 %v418, %v15
  %422 = vset.pattern.permute.xlu0 9
  %423 = vperm.xlu0 %422, %v419
  %v424 = vpop.permute.xlu0 %423
  %427 = vset.pattern.permute.xlu0 9
  %428 = vperm.xlu0 %427, %v420
  %v429 = vpop.permute.xlu0 %428
  %v431 = vadd.f32 %v249, %v424
  %v432 = vadd.f32 %v250, %v424
  %v433 = vadd.f32 %v251, %v424
  %v434 = vadd.f32 %v252, %v424
  %v435 = vadd.f32 %v253, %v429
  %v436 = vadd.f32 %v254, %v429
  %v437 = vadd.f32 %v255, %v429
  %v438 = vadd.f32 %v256, %v429
  %s439 = scalar_lea.vmem %s3, 64
  %440 = vst [vmem:[%s439] sm:$0xff] %v431
  %441 = vst [vmem:[%s439 + $0x8] sm:$0xff] %v432
  %442 = vst [vmem:[%s439 + $0x10] sm:$0xff] %v433
  %443 = vst [vmem:[%s439 + $0x18] sm:$0xff] %v434
  %444 = vst [vmem:[%s439 + $0x20] sm:$0xff] %v435
  %445 = vst [vmem:[%s439 + $0x28] sm:$0xff] %v436
  %446 = vst [vmem:[%s439 + $0x30] sm:$0xff] %v437
  %447 = vst [vmem:[%s439 + $0x38] sm:$0xff] %v438
  // Predicated region
  $region14: #{context_block.1} parent=0 // pred_check
    _
  $region15: #{context_block.1} parent=0 // pred_check_branch
    %449 = sbr.rel (0) target = $region17
  $region16: #{context_block.1} parent=0 // pred_region
    _
  $region17: #{context_block.1} parent=0 // pred_fallthru
    _
  // Predicated region
  $region18: #{context_block.1} parent=0 // pred_check
    _
  $region19: #{context_block.1} parent=0 // pred_check_branch
    %451 = sbr.rel (0) target = $region21
  $region20: #{context_block.1} parent=0 // pred_region
    _
  $region21: #{context_block.1} parent=0 // pred_fallthru
    _

</llo_original>
